<compile_context>
chip_gen: v6e
topology: v6e:2x2x1
jax: 0.10.0
libtpu: 0.0.40
codegen_flags: <defaults>
</compile_context>

<pallas_src>
import math
import functools

import jax
import jax.numpy as jnp
from jax.experimental import pallas as pl
from jax.experimental.pallas import tpu as pltpu


# ---------------------------------------------------------------------------
# Per-generation defaults (tile width, scoped VMEM limit).
# ---------------------------------------------------------------------------
def _tpu_defaults():
    tile = 256                      # v6e / v7x: 2x256^2 MXU -> 256-wide score tiles
    vmem_cap = 128 * 1024 * 1024
    try:
        vmem_cap = pltpu.get_tpu_info().vmem_capacity_bytes
    except Exception:
        pass
    try:
        kind = jax.devices()[0].device_kind.lower()
        if "v5 lite" in kind or "v5e" in kind or "v5litepod" in kind:
            tile = 128              # v5e: 4x128^2 MXU; bigger tiles don't help compute
    except Exception:
        pass
    # leave headroom: ~75% of physical VMEM, floor 32 MiB, cap 100 MiB
    # (v7x: 64 MiB physical -> 48 MiB limit; v5e/v6e: 128 MiB -> 96 MiB).
    vmem_limit = max(32 * 1024 * 1024, min(vmem_cap * 3 // 4, 100 * 1024 * 1024))
    return tile, int(vmem_limit)


# ---------------------------------------------------------------------------
# Kernel 1: fused q/k/v projections, head-major outputs, K pre-transposed.
#   grid = (B, seq-tiles, head-groups); weight column tiles streamed over groups.
#   1/sqrt(hd) is folded into W_q on the host (no in-kernel scale).
# ---------------------------------------------------------------------------
def _qkv_proj_kernel(xq_ref, xk_ref, xv_ref, wq_ref, wk_ref, wv_ref,
                     q_ref, k_ref, v_ref, *, hd, heads_per_group):
    xq = xq_ref[0]                                                # (tt, C) bf16
    xk = xk_ref[0]
    xv = xv_ref[0]
    # Wide MXU matmuls over the whole head group, f32 accumulation.
    q = jnp.dot(xq, wq_ref[...], preferred_element_type=jnp.float32)   # (tt, hg*hd)
    k = jnp.dot(xk, wk_ref[...], preferred_element_type=jnp.float32)
    v = jnp.dot(xv, wv_ref[...], preferred_element_type=jnp.float32)
    for i in range(heads_per_group):
        sl = slice(i * hd, (i + 1) * hd)
        q_ref[0, i] = q[:, sl].astype(q_ref.dtype)                # (tt, hd) head-major
        v_ref[0, i] = v[:, sl].astype(v_ref.dtype)
        # K emitted pre-transposed (hd, tt): one XLU transpose here instead of a
        # per-(qi, ki) relayout in the attention hot loop; K tile stays lane-dense.
        k_ref[0, i] = k[:, sl].T.astype(k_ref.dtype)


# ---------------------------------------------------------------------------
# Kernel 2: flash attention (online softmax) + fused output projection.
#   grid = (B, step); for causal the step axis enumerates ONLY the lower-triangular
#   (qi, ki) pairs via scalar-prefetched index tables.
# ---------------------------------------------------------------------------
def _flash_mha_kernel(qi_tab, ki_tab, q_ref, k_ref, v_ref, wo_hbm, bo_ref, o_ref,
                      wo_vmem, m_sc, l_sc, acc_sc, *, causal, tq, tk, nk, n_heads):
    s_idx = pl.program_id(1)
    qi = qi_tab[s_idx]
    ki = ki_tab[s_idx]

    @pl.when(s_idx == 0)
    def _load_wo():
        # One-time (per batch row) copy of W_o into a persistent, single-buffered
        # VMEM scratch: the pipeline never double-buffers the big weight.
        pltpu.sync_copy(wo_hbm, wo_vmem)

    @pl.when(ki == 0)
    def _init():
        m_sc[...] = jnp.full_like(m_sc, -1e30)   # finite: avoids -inf NaN pitfalls
        l_sc[...] = jnp.zeros_like(l_sc)
        acc_sc[...] = jnp.zeros_like(acc_sc)

    q = q_ref[0]          # (H, tq, hd) bf16, scale already folded into W_q
    k = k_ref[0]          # (H, hd, tk) bf16, pre-transposed
    v = v_ref[0]          # (H, tk, hd) bf16
    # head-batched QK^T with no in-kernel transpose (k already (hd, tk)).
    s = jnp.einsum('hqd,hdk->hqk', q, k,
                   preferred_element_type=jnp.float32)            # (H, tq, tk) f32
    if causal:
        # only the diagonal block actually masks anything; blocks above the
        # diagonal are never enumerated by the triangular grid.
        row = qi * tq + jax.lax.broadcasted_iota(jnp.int32, s.shape, 1)
        col = ki * tk + jax.lax.broadcasted_iota(jnp.int32, s.shape, 2)
        s = jnp.where(row >= col, s, -1e30)

    m_prev = m_sc[...]                                            # (H, tq, 1)
    m_new = jnp.maximum(m_prev, jnp.max(s, axis=-1, keepdims=True))
    alpha = jnp.exp(m_prev - m_new)
    p = jnp.exp(s - m_new)                                        # f32 softmax math
    l_sc[...] = alpha * l_sc[...] + jnp.sum(p, axis=-1, keepdims=True)
    acc_sc[...] = alpha * acc_sc[...] + jnp.einsum(
        'hqk,hkd->hqd', p.astype(v.dtype), v,
        preferred_element_type=jnp.float32)                       # (H, tq, hd)
    m_sc[...] = m_new

    last_k = qi if causal else (nk - 1)

    @pl.when(ki == last_k)
    def _finalize():
        inv_l = pl.reciprocal(l_sc[...], approx=True)             # EUP, not VALU div
        y_h = (acc_sc[...] * inv_l).astype(wo_vmem.dtype)         # (H, tq, hd) bf16
        # Fused output projection: per-head (tq,hd)@(hd,C) dots accumulated into a
        # single (tq, C) f32 value -- no (H, tq, C) intermediate is materialized.
        y = jnp.dot(y_h[0], wo_vmem[0], preferred_element_type=jnp.float32)
        for h in range(1, n_heads):
            y = y + jnp.dot(y_h[h], wo_vmem[h], preferred_element_type=jnp.float32)
        o_ref[0] = (y + bo_ref[...]).astype(o_ref.dtype)          # (tq, C)


# ---------------------------------------------------------------------------
# Wrapper
# ---------------------------------------------------------------------------
def multi_head_attention(x, params, *, n_heads, use_mask=True,
                         q_tile=None, kv_tile=None, compute_dtype=jnp.bfloat16):
    """x: dict with 'q','k','v' each (B, T, C). Returns (B, T, C) in x['q'].dtype."""
    xq, xk, xv = x["q"], x["k"], x["v"]
    B, T, C = xq.shape
    assert C % n_heads == 0
    hd = C // n_heads
    tile_default, vmem_limit = _tpu_defaults()
    tq = min(q_tile or tile_default, T)
    tk = tq if use_mask else min(kv_tile or tile_default, T)  # square tiles for causal
    assert T % tq == 0 and T % tk == 0
    nq, nk = T // tq, T // tk
    scale = 1.0 / math.sqrt(hd)

    # ---- one-time weight prep (in real use: hoist out of the per-call path) ----
    # PyTorch Linear computes x @ W.T ; pre-transpose to (in, out), cast to bf16.
    wq_t = (params["wq"].T * scale).astype(compute_dtype)   # 1/sqrt(hd) folded in
    wk_t = params["wk"].T.astype(compute_dtype)
    wv_t = params["wv"].T.astype(compute_dtype)
    # output projection reshaped head-major: (C_in, C_out) -> (H, hd, C_out)
    wo_h = params["wo"].T.reshape(n_heads, hd, C).astype(compute_dtype)
    bo = params["bo"].reshape(1, C).astype(jnp.float32)

    xq_c = xq.astype(compute_dtype)
    xk_c = xk.astype(compute_dtype)
    xv_c = xv.astype(compute_dtype)
    # TODO(synk): for self-attention (q is k is v), pass x once and fuse wq/wk/wv into
    # one (C, 3C) weight for a single wide MXU matmul per tile.

    # ---- Kernel 1: q/k/v projections, head-major out, streamed weight column tiles ----
    # head-group size: weight column tile ~<= 512 so no full (C,C) weight sits in VMEM.
    hg = n_heads
    while hg * hd > 512 and hg % 2 == 0:
        hg //= 2
    n_g = n_heads // hg

    act_spec = pl.BlockSpec((1, tq, C), lambda b, t, g: (b, t, 0))
    w_spec = pl.BlockSpec((C, hg * hd), lambda b, t, g: (0, g))
    qv_out_spec = pl.BlockSpec((1, hg, tq, hd), lambda b, t, g: (b, g, t, 0))
    k_out_spec = pl.BlockSpec((1, hg, hd, tq), lambda b, t, g: (b, g, 0, t))

    q_h, k_ht, v_h = pl.pallas_call(
        functools.partial(_qkv_proj_kernel, hd=hd, heads_per_group=hg),
        out_shape=(jax.ShapeDtypeStruct((B, n_heads, T, hd), compute_dtype),
                   jax.ShapeDtypeStruct((B, n_heads, hd, T), compute_dtype),
                   jax.ShapeDtypeStruct((B, n_heads, T, hd), compute_dtype)),
        grid_spec=pltpu.PrefetchScalarGridSpec(
            num_scalar_prefetch=0,
            grid=(B, nq, n_g),
            in_specs=[act_spec, act_spec, act_spec, w_spec, w_spec, w_spec],
            out_specs=[qv_out_spec, k_out_spec, qv_out_spec],
        ),
        compiler_params=pltpu.CompilerParams(
            dimension_semantics=("parallel", "parallel", "arbitrary"),
            vmem_limit_bytes=vmem_limit),
    )(xq_c, xk_c, xv_c, wq_t, wk_t, wv_t)

    # ---- Kernel 2: flash attention + fused output projection ----
    # Lower-triangular step enumeration for causal: skipped blocks simply do not
    # exist in the grid (no wasted ~0.35us grid steps, no wasted DMA).
    if use_mask:
        steps = [(i, j) for i in range(nq) for j in range(i + 1)]
    else:
        steps = [(i, j) for i in range(nq) for j in range(nk)]
    qi_tab = jnp.asarray([s[0] for s in steps], dtype=jnp.int32)
    ki_tab = jnp.asarray([s[1] for s in steps], dtype=jnp.int32)
    n_steps = len(steps)

    # Megacore (v7x): parallelism is over B; keep B >= 2 to feed both TensorCores.
    # Note: on v5e, deeper kv buffering (pipeline_mode=pl.Buffered(3)) can further
    # hide HBM latency if the DMA is exposed.
    out = pl.pallas_call(
        functools.partial(_flash_mha_kernel, causal=use_mask, tq=tq, tk=tk,
                          nk=nk, n_heads=n_heads),
        out_shape=jax.ShapeDtypeStruct((B, T, C), xq.dtype),
        grid_spec=pltpu.PrefetchScalarGridSpec(
            num_scalar_prefetch=2,
            grid=(B, n_steps),
            in_specs=[
                pl.BlockSpec((1, n_heads, tq, hd),
                             lambda b, s, qt, kt: (b, 0, qt[s], 0)),
                pl.BlockSpec((1, n_heads, hd, tk),
                             lambda b, s, qt, kt: (b, 0, 0, kt[s])),
                pl.BlockSpec((1, n_heads, tk, hd),
                             lambda b, s, qt, kt: (b, 0, kt[s], 0)),
                pl.BlockSpec(memory_space=pl.ANY),       # W_o: one-time manual copy
                pl.BlockSpec((1, C), lambda b, s, qt, kt: (0, 0)),
            ],
            out_specs=pl.BlockSpec((1, tq, C), lambda b, s, qt, kt: (b, qt[s], 0)),
            scratch_shapes=[
                pltpu.VMEM((n_heads, hd, C), compute_dtype),  # persistent W_o copy
                pltpu.VMEM((n_heads, tq, 1), jnp.float32),    # m (running max)
                pltpu.VMEM((n_heads, tq, 1), jnp.float32),    # l (running denom)
                pltpu.VMEM((n_heads, tq, hd), jnp.float32),   # acc (unnormalized out)
            ],
        ),
        compiler_params=pltpu.CompilerParams(
            dimension_semantics=("parallel", "arbitrary"),
            vmem_limit_bytes=vmem_limit),
    )(qi_tab, ki_tab, q_h, k_ht, v_h, wo_h, bo)
    return out


# ---------------------------------------------------------------------------
# Pure-JAX reference matching the PyTorch forward (eval mode, f32).
# ---------------------------------------------------------------------------
def _reference(x, params, *, n_heads, use_mask=True):
    xq, xk, xv = x["q"], x["k"], x["v"]
    B, T, C = xq.shape
    hd = C // n_heads
    q = xq @ params["wq"].T
    k = xk @ params["wk"].T
    v = xv @ params["wv"].T
    q = q.reshape(B, T, n_heads, hd).transpose(0, 2, 1, 3)
    k = k.reshape(B, T, n_heads, hd).transpose(0, 2, 1, 3)
    v = v.reshape(B, T, n_heads, hd).transpose(0, 2, 1, 3)
    att = (q @ k.transpose(0, 1, 3, 2)) / math.sqrt(hd)
    if use_mask:
        mask = jnp.tril(jnp.ones((T, T), dtype=bool))
        att = jnp.where(mask, att, -jnp.inf)
    att = jax.nn.softmax(att, axis=-1)
    y = (att @ v).transpose(0, 2, 1, 3).reshape(B, T, C)
    return y @ params["wo"].T + params["bo"]


if __name__ == "__main__":
    # Small config: B=2, T=8 (== window_size), C=32, n_heads=4, dropout=0.0
    B, T, C, n_heads = 2, 8, 32, 4
    key = jax.random.PRNGKey(0)
    ks = jax.random.split(key, 8)

    x = {
        "q": jax.random.normal(ks[0], (B, T, C), jnp.float32),
        "k": jax.random.normal(ks[1], (B, T, C), jnp.float32),
        "v": jax.random.normal(ks[2], (B, T, C), jnp.float32),
    }
    bound = 1.0 / math.sqrt(C)
    params = {
        "wq": jax.random.uniform(ks[3], (C, C), jnp.float32, -bound, bound),
        "wk": jax.random.uniform(ks[4], (C, C), jnp.float32, -bound, bound),
        "wv": jax.random.uniform(ks[5], (C, C), jnp.float32, -bound, bound),
        "wo": jax.random.uniform(ks[6], (C, C), jnp.float32, -bound, bound),
        "bo": jax.random.uniform(ks[7], (C,), jnp.float32, -bound, bound),
    }

    # causal path (use_mask=True)
    out_c = multi_head_attention(x, params, n_heads=n_heads, use_mask=True)
    out_c = jax.block_until_ready(out_c)
    ref_c = _reference(x, params, n_heads=n_heads, use_mask=True)
    assert out_c.shape == (B, T, C)
    # bf16 MXU inputs -> loosened tolerance vs the f32 reference
    assert jnp.allclose(out_c, ref_c, atol=3e-2, rtol=3e-2), "causal mismatch"

    # unmasked path (use_mask=False)
    out_n = multi_head_attention(x, params, n_heads=n_heads, use_mask=False)
    out_n = jax.block_until_ready(out_n)
    ref_n = _reference(x, params, n_heads=n_heads, use_mask=False)
    assert jnp.allclose(out_n, ref_n, atol=3e-2, rtol=3e-2), "unmasked mismatch"

    print("KERNEL_OK")
</pallas_src>

<mosaic_0001>
module attributes {stable_mosaic.version = 11 : i64} {
  func.func @_qkv_proj_kernel(%arg0: i32, %arg1: i32, %arg2: i32, %arg3: memref<1x8x32xbf16, #tpu.memory_space<vmem>>, %arg4: memref<1x8x32xbf16, #tpu.memory_space<vmem>>, %arg5: memref<1x8x32xbf16, #tpu.memory_space<vmem>>, %arg6: memref<32x32xbf16, #tpu.memory_space<vmem>>, %arg7: memref<32x32xbf16, #tpu.memory_space<vmem>>, %arg8: memref<32x32xbf16, #tpu.memory_space<vmem>>, %arg9: memref<1x4x8x8xbf16, #tpu.memory_space<vmem>>, %arg10: memref<1x4x8x8xbf16, #tpu.memory_space<vmem>>, %arg11: memref<1x4x8x8xbf16, #tpu.memory_space<vmem>>) attributes {dimension_semantics = [#tpu.dimension_semantics<parallel>, #tpu.dimension_semantics<parallel>, #tpu.dimension_semantics<arbitrary>], iteration_bounds = array<i64: 2, 1, 1>, scalar_prefetch = 0 : i64, scratch_operands = 0 : i64, tpu.core_type = #tpu.core_type<tc>, window_params = [{transform_indices = @transform_0, window_bounds = array<i64: 1, 8, 32>}, {transform_indices = @transform_1, window_bounds = array<i64: 1, 8, 32>}, {transform_indices = @transform_2, window_bounds = array<i64: 1, 8, 32>}, {transform_indices = @transform_3, window_bounds = array<i64: 32, 32>}, {transform_indices = @transform_4, window_bounds = array<i64: 32, 32>}, {transform_indices = @transform_5, window_bounds = array<i64: 32, 32>}, {transform_indices = @transform_6, window_bounds = array<i64: 1, 4, 8, 8>}, {transform_indices = @transform_7, window_bounds = array<i64: 1, 4, 8, 8>}, {transform_indices = @transform_8, window_bounds = array<i64: 1, 4, 8, 8>}]} {
    %c0 = arith.constant 0 : index
    %c0_0 = arith.constant 0 : index
    %c0_1 = arith.constant 0 : index
    %0 = vector.load %arg3[%c0, %c0_0, %c0_1] : memref<1x8x32xbf16, #tpu.memory_space<vmem>>, vector<1x8x32xbf16>
    %1 = vector.shape_cast %0 : vector<1x8x32xbf16> to vector<8x32xbf16>
    %c0_2 = arith.constant 0 : index
    %c0_3 = arith.constant 0 : index
    %c0_4 = arith.constant 0 : index
    %2 = vector.load %arg4[%c0_2, %c0_3, %c0_4] : memref<1x8x32xbf16, #tpu.memory_space<vmem>>, vector<1x8x32xbf16>
    %3 = vector.shape_cast %2 : vector<1x8x32xbf16> to vector<8x32xbf16>
    %c0_5 = arith.constant 0 : index
    %c0_6 = arith.constant 0 : index
    %c0_7 = arith.constant 0 : index
    %4 = vector.load %arg5[%c0_5, %c0_6, %c0_7] : memref<1x8x32xbf16, #tpu.memory_space<vmem>>, vector<1x8x32xbf16>
    %5 = vector.shape_cast %4 : vector<1x8x32xbf16> to vector<8x32xbf16>
    %c0_8 = arith.constant 0 : index
    %c0_9 = arith.constant 0 : index
    %6 = vector.load %arg6[%c0_8, %c0_9] : memref<32x32xbf16, #tpu.memory_space<vmem>>, vector<32x32xbf16>
    %cst = arith.constant dense<0.000000e+00> : vector<8x32xf32>
    %7 = tpu.matmul %1, %6, %cst {dimension_numbers = #tpu.dot_dimension_numbers<[1], [0], [0], [1], [0, 0, 1, 1], [], []>} : vector<8x32xbf16>, vector<32x32xbf16>, vector<8x32xf32> -> vector<8x32xf32>
    %c0_10 = arith.constant 0 : index
    %c0_11 = arith.constant 0 : index
    %8 = vector.load %arg7[%c0_10, %c0_11] : memref<32x32xbf16, #tpu.memory_space<vmem>>, vector<32x32xbf16>
    %cst_12 = arith.constant dense<0.000000e+00> : vector<8x32xf32>
    %9 = tpu.matmul %3, %8, %cst_12 {dimension_numbers = #tpu.dot_dimension_numbers<[1], [0], [0], [1], [0, 0, 1, 1], [], []>} : vector<8x32xbf16>, vector<32x32xbf16>, vector<8x32xf32> -> vector<8x32xf32>
    %c0_13 = arith.constant 0 : index
    %c0_14 = arith.constant 0 : index
    %10 = vector.load %arg8[%c0_13, %c0_14] : memref<32x32xbf16, #tpu.memory_space<vmem>>, vector<32x32xbf16>
    %cst_15 = arith.constant dense<0.000000e+00> : vector<8x32xf32>
    %11 = tpu.matmul %5, %10, %cst_15 {dimension_numbers = #tpu.dot_dimension_numbers<[1], [0], [0], [1], [0, 0, 1, 1], [], []>} : vector<8x32xbf16>, vector<32x32xbf16>, vector<8x32xf32> -> vector<8x32xf32>
    %12 = vector.extract_strided_slice %7 {offsets = [0, 0], sizes = [8, 8], strides = [1, 1]} : vector<8x32xf32> to vector<8x8xf32>
    %13 = arith.truncf %12 : vector<8x8xf32> to vector<8x8xbf16>
    %c0_16 = arith.constant 0 : index
    %c0_17 = arith.constant 0 : index
    %c0_18 = arith.constant 0 : index
    %c0_19 = arith.constant 0 : index
    %14 = vector.load %arg9[%c0_16, %c0_17, %c0_18, %c0_19] : memref<1x4x8x8xbf16, #tpu.memory_space<vmem>>, vector<1x1x8x8xbf16>
    %15 = vector.shape_cast %14 : vector<1x1x8x8xbf16> to vector<8x8xbf16>
    %16 = vector.shape_cast %13 : vector<8x8xbf16> to vector<1x1x8x8xbf16>
    tpu.vector_store %arg9[%c0_16, %c0_17, %c0_18, %c0_19], %16 {strides = array<i32>} : memref<1x4x8x8xbf16, #tpu.memory_space<vmem>>, vector<1x1x8x8xbf16>,
    %17 = vector.extract_strided_slice %11 {offsets = [0, 0], sizes = [8, 8], strides = [1, 1]} : vector<8x32xf32> to vector<8x8xf32>
    %18 = arith.truncf %17 : vector<8x8xf32> to vector<8x8xbf16>
    %c0_20 = arith.constant 0 : index
    %c0_21 = arith.constant 0 : index
    %c0_22 = arith.constant 0 : index
    %c0_23 = arith.constant 0 : index
    %19 = vector.load %arg11[%c0_20, %c0_21, %c0_22, %c0_23] : memref<1x4x8x8xbf16, #tpu.memory_space<vmem>>, vector<1x1x8x8xbf16>
    %20 = vector.shape_cast %19 : vector<1x1x8x8xbf16> to vector<8x8xbf16>
    %21 = vector.shape_cast %18 : vector<8x8xbf16> to vector<1x1x8x8xbf16>
    tpu.vector_store %arg11[%c0_20, %c0_21, %c0_22, %c0_23], %21 {strides = array<i32>} : memref<1x4x8x8xbf16, #tpu.memory_space<vmem>>, vector<1x1x8x8xbf16>,
    %22 = vector.extract_strided_slice %9 {offsets = [0, 0], sizes = [8, 8], strides = [1, 1]} : vector<8x32xf32> to vector<8x8xf32>
    %23 = tpu.transpose %22, [1, 0] : vector<8x8xf32> -> vector<8x8xf32>
    %24 = arith.truncf %23 : vector<8x8xf32> to vector<8x8xbf16>
    %c0_24 = arith.constant 0 : index
    %c0_25 = arith.constant 0 : index
    %c0_26 = arith.constant 0 : index
    %c0_27 = arith.constant 0 : index
    %25 = vector.load %arg10[%c0_24, %c0_25, %c0_26, %c0_27] : memref<1x4x8x8xbf16, #tpu.memory_space<vmem>>, vector<1x1x8x8xbf16>
    %26 = vector.shape_cast %25 : vector<1x1x8x8xbf16> to vector<8x8xbf16>
    %27 = vector.shape_cast %24 : vector<8x8xbf16> to vector<1x1x8x8xbf16>
    tpu.vector_store %arg10[%c0_24, %c0_25, %c0_26, %c0_27], %27 {strides = array<i32>} : memref<1x4x8x8xbf16, #tpu.memory_space<vmem>>, vector<1x1x8x8xbf16>,
    %28 = vector.extract_strided_slice %7 {offsets = [0, 8], sizes = [8, 8], strides = [1, 1]} : vector<8x32xf32> to vector<8x8xf32>
    %29 = arith.truncf %28 : vector<8x8xf32> to vector<8x8xbf16>
    %c0_28 = arith.constant 0 : index
    %c1 = arith.constant 1 : index
    %c0_29 = arith.constant 0 : index
    %c0_30 = arith.constant 0 : index
    %30 = vector.load %arg9[%c0_28, %c1, %c0_29, %c0_30] : memref<1x4x8x8xbf16, #tpu.memory_space<vmem>>, vector<1x1x8x8xbf16>
    %31 = vector.shape_cast %30 : vector<1x1x8x8xbf16> to vector<8x8xbf16>
    %32 = vector.shape_cast %29 : vector<8x8xbf16> to vector<1x1x8x8xbf16>
    tpu.vector_store %arg9[%c0_28, %c1, %c0_29, %c0_30], %32 {strides = array<i32>} : memref<1x4x8x8xbf16, #tpu.memory_space<vmem>>, vector<1x1x8x8xbf16>,
    %33 = vector.extract_strided_slice %11 {offsets = [0, 8], sizes = [8, 8], strides = [1, 1]} : vector<8x32xf32> to vector<8x8xf32>
    %34 = arith.truncf %33 : vector<8x8xf32> to vector<8x8xbf16>
    %c0_31 = arith.constant 0 : index
    %c1_32 = arith.constant 1 : index
    %c0_33 = arith.constant 0 : index
    %c0_34 = arith.constant 0 : index
    %35 = vector.load %arg11[%c0_31, %c1_32, %c0_33, %c0_34] : memref<1x4x8x8xbf16, #tpu.memory_space<vmem>>, vector<1x1x8x8xbf16>
    %36 = vector.shape_cast %35 : vector<1x1x8x8xbf16> to vector<8x8xbf16>
    %37 = vector.shape_cast %34 : vector<8x8xbf16> to vector<1x1x8x8xbf16>
    tpu.vector_store %arg11[%c0_31, %c1_32, %c0_33, %c0_34], %37 {strides = array<i32>} : memref<1x4x8x8xbf16, #tpu.memory_space<vmem>>, vector<1x1x8x8xbf16>,
    %38 = vector.extract_strided_slice %9 {offsets = [0, 8], sizes = [8, 8], strides = [1, 1]} : vector<8x32xf32> to vector<8x8xf32>
    %39 = tpu.transpose %38, [1, 0] : vector<8x8xf32> -> vector<8x8xf32>
    %40 = arith.truncf %39 : vector<8x8xf32> to vector<8x8xbf16>
    %c0_35 = arith.constant 0 : index
    %c1_36 = arith.constant 1 : index
    %c0_37 = arith.constant 0 : index
    %c0_38 = arith.constant 0 : index
    %41 = vector.load %arg10[%c0_35, %c1_36, %c0_37, %c0_38] : memref<1x4x8x8xbf16, #tpu.memory_space<vmem>>, vector<1x1x8x8xbf16>
    %42 = vector.shape_cast %41 : vector<1x1x8x8xbf16> to vector<8x8xbf16>
    %43 = vector.shape_cast %40 : vector<8x8xbf16> to vector<1x1x8x8xbf16>
    tpu.vector_store %arg10[%c0_35, %c1_36, %c0_37, %c0_38], %43 {strides = array<i32>} : memref<1x4x8x8xbf16, #tpu.memory_space<vmem>>, vector<1x1x8x8xbf16>,
    %44 = vector.extract_strided_slice %7 {offsets = [0, 16], sizes = [8, 8], strides = [1, 1]} : vector<8x32xf32> to vector<8x8xf32>
    %45 = arith.truncf %44 : vector<8x8xf32> to vector<8x8xbf16>
    %c0_39 = arith.constant 0 : index
    %c2 = arith.constant 2 : index
    %c0_40 = arith.constant 0 : index
    %c0_41 = arith.constant 0 : index
    %46 = vector.load %arg9[%c0_39, %c2, %c0_40, %c0_41] : memref<1x4x8x8xbf16, #tpu.memory_space<vmem>>, vector<1x1x8x8xbf16>
    %47 = vector.shape_cast %46 : vector<1x1x8x8xbf16> to vector<8x8xbf16>
    %48 = vector.shape_cast %45 : vector<8x8xbf16> to vector<1x1x8x8xbf16>
    tpu.vector_store %arg9[%c0_39, %c2, %c0_40, %c0_41], %48 {strides = array<i32>} : memref<1x4x8x8xbf16, #tpu.memory_space<vmem>>, vector<1x1x8x8xbf16>,
    %49 = vector.extract_strided_slice %11 {offsets = [0, 16], sizes = [8, 8], strides = [1, 1]} : vector<8x32xf32> to vector<8x8xf32>
    %50 = arith.truncf %49 : vector<8x8xf32> to vector<8x8xbf16>
    %c0_42 = arith.constant 0 : index
    %c2_43 = arith.constant 2 : index
    %c0_44 = arith.constant 0 : index
    %c0_45 = arith.constant 0 : index
    %51 = vector.load %arg11[%c0_42, %c2_43, %c0_44, %c0_45] : memref<1x4x8x8xbf16, #tpu.memory_space<vmem>>, vector<1x1x8x8xbf16>
    %52 = vector.shape_cast %51 : vector<1x1x8x8xbf16> to vector<8x8xbf16>
    %53 = vector.shape_cast %50 : vector<8x8xbf16> to vector<1x1x8x8xbf16>
    tpu.vector_store %arg11[%c0_42, %c2_43, %c0_44, %c0_45], %53 {strides = array<i32>} : memref<1x4x8x8xbf16, #tpu.memory_space<vmem>>, vector<1x1x8x8xbf16>,
    %54 = vector.extract_strided_slice %9 {offsets = [0, 16], sizes = [8, 8], strides = [1, 1]} : vector<8x32xf32> to vector<8x8xf32>
    %55 = tpu.transpose %54, [1, 0] : vector<8x8xf32> -> vector<8x8xf32>
    %56 = arith.truncf %55 : vector<8x8xf32> to vector<8x8xbf16>
    %c0_46 = arith.constant 0 : index
    %c2_47 = arith.constant 2 : index
    %c0_48 = arith.constant 0 : index
    %c0_49 = arith.constant 0 : index
    %57 = vector.load %arg10[%c0_46, %c2_47, %c0_48, %c0_49] : memref<1x4x8x8xbf16, #tpu.memory_space<vmem>>, vector<1x1x8x8xbf16>
    %58 = vector.shape_cast %57 : vector<1x1x8x8xbf16> to vector<8x8xbf16>
    %59 = vector.shape_cast %56 : vector<8x8xbf16> to vector<1x1x8x8xbf16>
    tpu.vector_store %arg10[%c0_46, %c2_47, %c0_48, %c0_49], %59 {strides = array<i32>} : memref<1x4x8x8xbf16, #tpu.memory_space<vmem>>, vector<1x1x8x8xbf16>,
    %60 = vector.extract_strided_slice %7 {offsets = [0, 24], sizes = [8, 8], strides = [1, 1]} : vector<8x32xf32> to vector<8x8xf32>
    %61 = arith.truncf %60 : vector<8x8xf32> to vector<8x8xbf16>
    %c0_50 = arith.constant 0 : index
    %c3 = arith.constant 3 : index
    %c0_51 = arith.constant 0 : index
    %c0_52 = arith.constant 0 : index
    %62 = vector.load %arg9[%c0_50, %c3, %c0_51, %c0_52] : memref<1x4x8x8xbf16, #tpu.memory_space<vmem>>, vector<1x1x8x8xbf16>
    %63 = vector.shape_cast %62 : vector<1x1x8x8xbf16> to vector<8x8xbf16>
    %64 = vector.shape_cast %61 : vector<8x8xbf16> to vector<1x1x8x8xbf16>
    tpu.vector_store %arg9[%c0_50, %c3, %c0_51, %c0_52], %64 {strides = array<i32>} : memref<1x4x8x8xbf16, #tpu.memory_space<vmem>>, vector<1x1x8x8xbf16>,
    %65 = vector.extract_strided_slice %11 {offsets = [0, 24], sizes = [8, 8], strides = [1, 1]} : vector<8x32xf32> to vector<8x8xf32>
    %66 = arith.truncf %65 : vector<8x8xf32> to vector<8x8xbf16>
    %c0_53 = arith.constant 0 : index
    %c3_54 = arith.constant 3 : index
    %c0_55 = arith.constant 0 : index
    %c0_56 = arith.constant 0 : index
    %67 = vector.load %arg11[%c0_53, %c3_54, %c0_55, %c0_56] : memref<1x4x8x8xbf16, #tpu.memory_space<vmem>>, vector<1x1x8x8xbf16>
    %68 = vector.shape_cast %67 : vector<1x1x8x8xbf16> to vector<8x8xbf16>
    %69 = vector.shape_cast %66 : vector<8x8xbf16> to vector<1x1x8x8xbf16>
    tpu.vector_store %arg11[%c0_53, %c3_54, %c0_55, %c0_56], %69 {strides = array<i32>} : memref<1x4x8x8xbf16, #tpu.memory_space<vmem>>, vector<1x1x8x8xbf16>,
    %70 = vector.extract_strided_slice %9 {offsets = [0, 24], sizes = [8, 8], strides = [1, 1]} : vector<8x32xf32> to vector<8x8xf32>
    %71 = tpu.transpose %70, [1, 0] : vector<8x8xf32> -> vector<8x8xf32>
    %72 = arith.truncf %71 : vector<8x8xf32> to vector<8x8xbf16>
    %c0_57 = arith.constant 0 : index
    %c3_58 = arith.constant 3 : index
    %c0_59 = arith.constant 0 : index
    %c0_60 = arith.constant 0 : index
    %73 = vector.load %arg10[%c0_57, %c3_58, %c0_59, %c0_60] : memref<1x4x8x8xbf16, #tpu.memory_space<vmem>>, vector<1x1x8x8xbf16>
    %74 = vector.shape_cast %73 : vector<1x1x8x8xbf16> to vector<8x8xbf16>
    %75 = vector.shape_cast %72 : vector<8x8xbf16> to vector<1x1x8x8xbf16>
    tpu.vector_store %arg10[%c0_57, %c3_58, %c0_59, %c0_60], %75 {strides = array<i32>} : memref<1x4x8x8xbf16, #tpu.memory_space<vmem>>, vector<1x1x8x8xbf16>,
    return
  }
  func.func @transform_0(%arg0: i32, %arg1: i32, %arg2: i32) -> (i32, i32, i32) {
    %c0_i32 = arith.constant 0 : i32
    %c0_i32_0 = arith.constant 0 : i32
    return %arg0, %arg1, %c0_i32 : i32, i32, i32
  }
  func.func @transform_1(%arg0: i32, %arg1: i32, %arg2: i32) -> (i32, i32, i32) {
    %c0_i32 = arith.constant 0 : i32
    %c0_i32_0 = arith.constant 0 : i32
    return %arg0, %arg1, %c0_i32 : i32, i32, i32
  }
  func.func @transform_2(%arg0: i32, %arg1: i32, %arg2: i32) -> (i32, i32, i32) {
    %c0_i32 = arith.constant 0 : i32
    %c0_i32_0 = arith.constant 0 : i32
    return %arg0, %arg1, %c0_i32 : i32, i32, i32
  }
  func.func @transform_3(%arg0: i32, %arg1: i32, %arg2: i32) -> (i32, i32) {
    %c0_i32 = arith.constant 0 : i32
    %c0_i32_0 = arith.constant 0 : i32
    return %c0_i32, %arg2 : i32, i32
  }
  func.func @transform_4(%arg0: i32, %arg1: i32, %arg2: i32) -> (i32, i32) {
    %c0_i32 = arith.constant 0 : i32
    %c0_i32_0 = arith.constant 0 : i32
    return %c0_i32, %arg2 : i32, i32
  }
  func.func @transform_5(%arg0: i32, %arg1: i32, %arg2: i32) -> (i32, i32) {
    %c0_i32 = arith.constant 0 : i32
    %c0_i32_0 = arith.constant 0 : i32
    return %c0_i32, %arg2 : i32, i32
  }
  func.func @transform_6(%arg0: i32, %arg1: i32, %arg2: i32) -> (i32, i32, i32, i32) {
    %c0_i32 = arith.constant 0 : i32
    %c0_i32_0 = arith.constant 0 : i32
    return %arg0, %arg2, %arg1, %c0_i32 : i32, i32, i32, i32
  }
  func.func @transform_7(%arg0: i32, %arg1: i32, %arg2: i32) -> (i32, i32, i32, i32) {
    %c0_i32 = arith.constant 0 : i32
    %c0_i32_0 = arith.constant 0 : i32
    return %arg0, %arg2, %c0_i32, %arg1 : i32, i32, i32, i32
  }
  func.func @transform_8(%arg0: i32, %arg1: i32, %arg2: i32) -> (i32, i32, i32, i32) {
    %c0_i32 = arith.constant 0 : i32
    %c0_i32_0 = arith.constant 0 : i32
    return %arg0, %arg2, %arg1, %c0_i32 : i32, i32, i32, i32
  }
}

</mosaic_0001>

<llo_original>
// kernel: tpu_custom_call.1
$region0: #{tpu_custom_call.1}
  #allocation0 [shape = 'u32[]', space=smem, size = 0x4, offset = 0x4, fixed_abs, tag = 'smem constant byte address 0x4 - core index']
  #allocation1 [shape = 'u32[144,128]{1,0:T(1,128)}', space=vmem, size = 0x12000, scoped, tag = 'internal scratch']
  %s0 = inlined_call_operand.hbm [shape: bf16[2,8,32], index: 0, kind: input, shape index: {}]
  %s1 = inlined_call_operand.hbm [shape: bf16[2,8,32], index: 1, kind: input, shape index: {}]
  %s2 = inlined_call_operand.hbm [shape: bf16[2,8,32], index: 2, kind: input, shape index: {}]
  %s3 = inlined_call_operand.hbm [shape: bf16[32,32], index: 3, kind: input, shape index: {}]
  %s4 = inlined_call_operand.hbm [shape: bf16[32,32], index: 4, kind: input, shape index: {}]
  %s5 = inlined_call_operand.hbm [shape: bf16[32,32], index: 5, kind: input, shape index: {}]
  %s6 = inlined_call_operand.hbm [shape: bf16[2,4,8,8], index: 6, kind: output, shape index: {0}]
  %s7 = inlined_call_operand.hbm [shape: bf16[2,4,8,8], index: 7, kind: output, shape index: {1}]
  %s8 = inlined_call_operand.hbm [shape: bf16[2,4,8,8], index: 8, kind: output, shape index: {2}]
  %9 = xla_tuple %s6, %s7, %s8
  %s10 = sld [smem:[#allocation0]]
  $region97: #{tpu_custom_call.1} parent=0
    _
  %s12 = ssub.s32 1, %s10
  %s13 = scalar_select 0, %s12, %s10
  $region1: #{tpu_custom_call.1} parent=0
    #allocation2 [shape = 'u8[4096]{0}', space=vmem, size = 0x1000, scoped, tag = 'input window, operand 0']
    #allocation3 [shape = 's32[2]{0}', space=sflag, size = 0x8, scoped, tag = 'scoped memory for tpu_custom_call.1']
    #allocation4 [shape = 's32[2]{0}', space=sflag, size = 0x8, scoped, tag = 'scoped memory for tpu_custom_call.1']
    #allocation5 [shape = 'u8[4096]{0}', space=vmem, size = 0x1000, scoped, tag = 'input window, operand 1']
    #allocation6 [shape = 's32[2]{0}', space=sflag, size = 0x8, scoped, tag = 'scoped memory for tpu_custom_call.1']
    #allocation7 [shape = 'u8[4096]{0}', space=vmem, size = 0x1000, scoped, tag = 'input window, operand 2']
    #allocation8 [shape = 'u8[8192]{0}', space=vmem, size = 0x2000, scoped, tag = 'input window, operand 3, single buffered']
    #allocation9 [shape = 's32[1]{0}', space=sflag, size = 0x4, scoped, tag = 'scoped memory for tpu_custom_call.1']
    #allocation10 [shape = 'u8[8192]{0}', space=vmem, size = 0x2000, scoped, tag = 'input window, operand 4, single buffered']
    #allocation11 [shape = 'u8[8192]{0}', space=vmem, size = 0x2000, scoped, tag = 'input window, operand 5, single buffered']
    #allocation12 [shape = 's32[1]{0}', space=sflag, size = 0x4, scoped, tag = 'scoped memory for tpu_custom_call.1']
    #allocation13 [shape = 'u8[16384]{0}', space=vmem, size = 0x4000, scoped, tag = 'output window, operand 0']
    #allocation14 [shape = 'u8[16384]{0}', space=vmem, size = 0x4000, scoped, tag = 'output window, operand 1']
    #allocation15 [shape = 's32[2]{0}', space=sflag, size = 0x8, scoped, tag = 'scoped memory for tpu_custom_call.1']
    #allocation16 [shape = 'u8[16384]{0}', space=vmem, size = 0x4000, scoped, tag = 'output window, operand 2']
    %14 = vsyncpa [#allocation3], 0
    %s15 = scalar_lea.sflag [#allocation3], 1
    %16 = vsyncpa %s15, 0
    %17 = vsyncpa [#allocation6], 0
    %s18 = scalar_lea.sflag [#allocation6], 1
    %19 = vsyncpa %s18, 0
    %20 = vsyncpa [#allocation9], 0
    %21 = vsyncpa [#allocation12], 0
    %22 = vsyncpa [#allocation4], 0
    %s23 = scalar_lea.sflag [#allocation4], 1
    %24 = vsyncpa %s23, 0
    %25 = vsyncpa [#allocation15], 0
    %s26 = scalar_lea.sflag [#allocation15], 1
    %27 = vsyncpa %s26, 0
    loop: start=0, step=1, limit=4
    $region2: #{tpu_custom_call.1} parent=1 // loop_pre_header
      _
    $region3: #{tpu_custom_call.1} parent=1 // loop_header
      %s29 = sphi 0, %s33
      %p30 = scmp.ge.s32.totalorder %s29, 4
      %s36 = sphi 0, %s55
      %s37 = sphi 0, %s51
      %s38 = sphi 0, %s47
      %s39 = sphi 0, %s36
      %s40 = sphi 0, %s37
      %s41 = sphi 0, %s38
      %s42 = sphi 0, %s39
      %s43 = sphi 0, %s40
      %s44 = sphi 0, %s41
      %s60 = sphi 0, %s62
      %s63 = sphi 0, %s60
      %s64 = sphi 0, %s63
      %s80 = sphi 0, %s64
      %s88 = sphi 0, %s90
      %s91 = sphi 0, %s88
      %s92 = sphi 0, %s91
      %s108 = sphi 0, %s92
      %s116 = sphi 0, %s118
      %s119 = sphi 0, %s116
      %s120 = sphi 0, %s119
      %s136 = sphi 0, %s120
      %s142 = sphi 0, %s144
      %s145 = sphi 0, %s142
      %s146 = sphi 0, %s145
      %s162 = sphi 0, %s146
      %s168 = sphi 0, %s170
      %s171 = sphi 0, %s168
      %s172 = sphi 0, %s171
      %s188 = sphi 0, %s172
      %s194 = sphi 0, %s196
      %s197 = sphi 0, %s194
      %s198 = sphi 0, %s197
      %s214 = sphi 0, %s198
      %s224 = sphi 0, %s226
      %s227 = sphi 0, %s224
      %s228 = sphi 0, %s227
      %s244 = sphi 0, %s228
      %s254 = sphi 0, %s256
      %s257 = sphi 0, %s254
      %s258 = sphi 0, %s257
      %s274 = sphi 0, %s258
      %s284 = sphi 0, %s286
      %s287 = sphi 0, %s284
      %s288 = sphi 0, %s287
      %s304 = sphi 0, %s288
    $region4: #{tpu_custom_call.1} parent=1 // loop_header_branch
      %32 = sbr.rel (%p30) target = $region8
    $region5: #{tpu_custom_call.1} parent=1 // loop_body
      %s34 = ssub.s32 %s29, 1
      %s35 = ssub.s32 %s29, 2
      %s45 = sadd.s32 1, %s38
      %p46 = scmp.ge.s32.totalorder %s45, 1
      %s47 = scalar_select %p46, 0, %s45
      %s48 = sadd.s32 1, %s37
      %s49 = scalar_select %p46, %s48, %s37
      %p50 = scmp.ge.s32.totalorder %s49, 1
      %s51 = scalar_select %p50, 0, %s49
      %s52 = sadd.s32 1, %s36
      %s53 = scalar_select %p50, %s52, %s36
      %p54 = scmp.ge.s32.totalorder %s53, 2
      %s55 = scalar_select %p54, 0, %s53
      %s56 = ssub.s32 %s36, %s55
      %s57 = ssub.s32 %s37, %s51
      %s58 = sor.u32 %s56, %s57
      %p59 = scmp.eq.s32.totalorder %s58, 0
      %s61 = sadd.s32 %s60, 1
      %s62 = scalar_select %p59, %s60, %s61
      %p65 = pneg %p59
      %p66 = scmp.eq.s32.totalorder %s29, 1
      %p67 = por %p65, %p66
      %p68 = scmp.ne.s32.totalorder %s60, %s63
      %p69 = scmp.eq.s32.totalorder %s29, 0
      %p70 = por %p68, %p69
      %p71 = scmp.ne.s32.totalorder %s60, %s63
      %p72 = scmp.eq.s32.totalorder %s34, 1
      %p73 = por %p71, %p72
      %p74 = scmp.ne.s32.totalorder %s63, %s64
      %p75 = scmp.eq.s32.totalorder %s34, 0
      %p76 = por %p74, %p75
      %p77 = scmp.ne.s32.totalorder %s63, %s64
      %p78 = scmp.eq.s32.totalorder %s35, 1
      %p79 = por %p77, %p78
      %p81 = scmp.ne.s32.totalorder %s64, %s80
      %p82 = scmp.eq.s32.totalorder %s35, 0
      %p83 = por %p81, %p82
      %s84 = ssub.s32 %s36, %s55
      %s85 = ssub.s32 %s37, %s51
      %s86 = sor.u32 %s84, %s85
      %p87 = scmp.eq.s32.totalorder %s86, 0
      %s89 = sadd.s32 %s88, 1
      %s90 = scalar_select %p87, %s88, %s89
      %p93 = pneg %p87
      %p94 = scmp.eq.s32.totalorder %s29, 1
      %p95 = por %p93, %p94
      %p96 = scmp.ne.s32.totalorder %s88, %s91
      %p97 = scmp.eq.s32.totalorder %s29, 0
      %p98 = por %p96, %p97
      %p99 = scmp.ne.s32.totalorder %s88, %s91
      %p100 = scmp.eq.s32.totalorder %s34, 1
      %p101 = por %p99, %p100
      %p102 = scmp.ne.s32.totalorder %s91, %s92
      %p103 = scmp.eq.s32.totalorder %s34, 0
      %p104 = por %p102, %p103
      %p105 = scmp.ne.s32.totalorder %s91, %s92
      %p106 = scmp.eq.s32.totalorder %s35, 1
      %p107 = por %p105, %p106
      %p109 = scmp.ne.s32.totalorder %s92, %s108
      %p110 = scmp.eq.s32.totalorder %s35, 0
      %p111 = por %p109, %p110
      %s112 = ssub.s32 %s36, %s55
      %s113 = ssub.s32 %s37, %s51
      %s114 = sor.u32 %s112, %s113
      %p115 = scmp.eq.s32.totalorder %s114, 0
      %s117 = sadd.s32 %s116, 1
      %s118 = scalar_select %p115, %s116, %s117
      %p121 = pneg %p115
      %p122 = scmp.eq.s32.totalorder %s29, 1
      %p123 = por %p121, %p122
      %p124 = scmp.ne.s32.totalorder %s116, %s119
      %p125 = scmp.eq.s32.totalorder %s29, 0
      %p126 = por %p124, %p125
      %p127 = scmp.ne.s32.totalorder %s116, %s119
      %p128 = scmp.eq.s32.totalorder %s34, 1
      %p129 = por %p127, %p128
      %p130 = scmp.ne.s32.totalorder %s119, %s120
      %p131 = scmp.eq.s32.totalorder %s34, 0
      %p132 = por %p130, %p131
      %p133 = scmp.ne.s32.totalorder %s119, %s120
      %p134 = scmp.eq.s32.totalorder %s35, 1
      %p135 = por %p133, %p134
      %p137 = scmp.ne.s32.totalorder %s120, %s136
      %p138 = scmp.eq.s32.totalorder %s35, 0
      %p139 = por %p137, %p138
      %s140 = ssub.s32 %s38, %s47
      %p141 = scmp.eq.s32.totalorder %s140, 0
      %s143 = sadd.s32 %s142, 1
      %s144 = scalar_select %p141, %s142, %s143
      %p147 = pneg %p141
      %p148 = scmp.eq.s32.totalorder %s29, 1
      %p149 = por %p147, %p148
      %p150 = scmp.ne.s32.totalorder %s142, %s145
      %p151 = scmp.eq.s32.totalorder %s29, 0
      %p152 = por %p150, %p151
      %p153 = scmp.ne.s32.totalorder %s142, %s145
      %p154 = scmp.eq.s32.totalorder %s34, 1
      %p155 = por %p153, %p154
      %p156 = scmp.ne.s32.totalorder %s145, %s146
      %p157 = scmp.eq.s32.totalorder %s34, 0
      %p158 = por %p156, %p157
      %p159 = scmp.ne.s32.totalorder %s145, %s146
      %p160 = scmp.eq.s32.totalorder %s35, 1
      %p161 = por %p159, %p160
      %p163 = scmp.ne.s32.totalorder %s146, %s162
      %p164 = scmp.eq.s32.totalorder %s35, 0
      %p165 = por %p163, %p164
      %s166 = ssub.s32 %s38, %s47
      %p167 = scmp.eq.s32.totalorder %s166, 0
      %s169 = sadd.s32 %s168, 1
      %s170 = scalar_select %p167, %s168, %s169
      %p173 = pneg %p167
      %p174 = scmp.eq.s32.totalorder %s29, 1
      %p175 = por %p173, %p174
      %p176 = scmp.ne.s32.totalorder %s168, %s171
      %p177 = scmp.eq.s32.totalorder %s29, 0
      %p178 = por %p176, %p177
      %p179 = scmp.ne.s32.totalorder %s168, %s171
      %p180 = scmp.eq.s32.totalorder %s34, 1
      %p181 = por %p179, %p180
      %p182 = scmp.ne.s32.totalorder %s171, %s172
      %p183 = scmp.eq.s32.totalorder %s34, 0
      %p184 = por %p182, %p183
      %p185 = scmp.ne.s32.totalorder %s171, %s172
      %p186 = scmp.eq.s32.totalorder %s35, 1
      %p187 = por %p185, %p186
      %p189 = scmp.ne.s32.totalorder %s172, %s188
      %p190 = scmp.eq.s32.totalorder %s35, 0
      %p191 = por %p189, %p190
      %s192 = ssub.s32 %s38, %s47
      %p193 = scmp.eq.s32.totalorder %s192, 0
      %s195 = sadd.s32 %s194, 1
      %s196 = scalar_select %p193, %s194, %s195
      %p199 = pneg %p193
      %p200 = scmp.eq.s32.totalorder %s29, 1
      %p201 = por %p199, %p200
      %p202 = scmp.ne.s32.totalorder %s194, %s197
      %p203 = scmp.eq.s32.totalorder %s29, 0
      %p204 = por %p202, %p203
      %p205 = scmp.ne.s32.totalorder %s194, %s197
      %p206 = scmp.eq.s32.totalorder %s34, 1
      %p207 = por %p205, %p206
      %p208 = scmp.ne.s32.totalorder %s197, %s198
      %p209 = scmp.eq.s32.totalorder %s34, 0
      %p210 = por %p208, %p209
      %p211 = scmp.ne.s32.totalorder %s197, %s198
      %p212 = scmp.eq.s32.totalorder %s35, 1
      %p213 = por %p211, %p212
      %p215 = scmp.ne.s32.totalorder %s198, %s214
      %p216 = scmp.eq.s32.totalorder %s35, 0
      %p217 = por %p215, %p216
      %s218 = ssub.s32 %s36, %s55
      %s219 = ssub.s32 %s38, %s47
      %s220 = sor.u32 %s218, %s219
      %s221 = ssub.s32 %s37, %s51
      %s222 = sor.u32 %s220, %s221
      %p223 = scmp.eq.s32.totalorder %s222, 0
      %s225 = sadd.s32 %s224, 1
      %s226 = scalar_select %p223, %s224, %s225
      %p229 = pneg %p223
      %p230 = scmp.eq.s32.totalorder %s29, 1
      %p231 = por %p229, %p230
      %p232 = scmp.ne.s32.totalorder %s224, %s227
      %p233 = scmp.eq.s32.totalorder %s29, 0
      %p234 = por %p232, %p233
      %p235 = scmp.ne.s32.totalorder %s224, %s227
      %p236 = scmp.eq.s32.totalorder %s34, 1
      %p237 = por %p235, %p236
      %p238 = scmp.ne.s32.totalorder %s227, %s228
      %p239 = scmp.eq.s32.totalorder %s34, 0
      %p240 = por %p238, %p239
      %p241 = scmp.ne.s32.totalorder %s227, %s228
      %p242 = scmp.eq.s32.totalorder %s35, 1
      %p243 = por %p241, %p242
      %p245 = scmp.ne.s32.totalorder %s228, %s244
      %p246 = scmp.eq.s32.totalorder %s35, 0
      %p247 = por %p245, %p246
      %s248 = ssub.s32 %s36, %s55
      %s249 = ssub.s32 %s38, %s47
      %s250 = sor.u32 %s248, %s249
      %s251 = ssub.s32 %s37, %s51
      %s252 = sor.u32 %s250, %s251
      %p253 = scmp.eq.s32.totalorder %s252, 0
      %s255 = sadd.s32 %s254, 1
      %s256 = scalar_select %p253, %s254, %s255
      %p259 = pneg %p253
      %p260 = scmp.eq.s32.totalorder %s29, 1
      %p261 = por %p259, %p260
      %p262 = scmp.ne.s32.totalorder %s254, %s257
      %p263 = scmp.eq.s32.totalorder %s29, 0
      %p264 = por %p262, %p263
      %p265 = scmp.ne.s32.totalorder %s254, %s257
      %p266 = scmp.eq.s32.totalorder %s34, 1
      %p267 = por %p265, %p266
      %p268 = scmp.ne.s32.totalorder %s257, %s258
      %p269 = scmp.eq.s32.totalorder %s34, 0
      %p270 = por %p268, %p269
      %p271 = scmp.ne.s32.totalorder %s257, %s258
      %p272 = scmp.eq.s32.totalorder %s35, 1
      %p273 = por %p271, %p272
      %p275 = scmp.ne.s32.totalorder %s258, %s274
      %p276 = scmp.eq.s32.totalorder %s35, 0
      %p277 = por %p275, %p276
      %s278 = ssub.s32 %s36, %s55
      %s279 = ssub.s32 %s38, %s47
      %s280 = sor.u32 %s278, %s279
      %s281 = ssub.s32 %s37, %s51
      %s282 = sor.u32 %s280, %s281
      %p283 = scmp.eq.s32.totalorder %s282, 0
      %s285 = sadd.s32 %s284, 1
      %s286 = scalar_select %p283, %s284, %s285
      %p289 = pneg %p283
      %p290 = scmp.eq.s32.totalorder %s29, 1
      %p291 = por %p289, %p290
      %p292 = scmp.ne.s32.totalorder %s284, %s287
      %p293 = scmp.eq.s32.totalorder %s29, 0
      %p294 = por %p292, %p293
      %p295 = scmp.ne.s32.totalorder %s284, %s287
      %p296 = scmp.eq.s32.totalorder %s34, 1
      %p297 = por %p295, %p296
      %p298 = scmp.ne.s32.totalorder %s287, %s288
      %p299 = scmp.eq.s32.totalorder %s34, 0
      %p300 = por %p298, %p299
      %p301 = scmp.ne.s32.totalorder %s287, %s288
      %p302 = scmp.eq.s32.totalorder %s35, 1
      %p303 = por %p301, %p302
      %p305 = scmp.ne.s32.totalorder %s288, %s304
      %p306 = scmp.eq.s32.totalorder %s35, 0
      %p307 = por %p305, %p306
      %p308 = scmp.le.s32.totalorder 1, %s29
      %p309 = scmp.lt.s32.totalorder %s29, 3
      %p310 = pnand %p308, %p309
      %p311 = pneg %p310
      // Predicated region
      $region9: #{tpu_custom_call.1} parent=5 // pred_check
        _
      $region10: #{tpu_custom_call.1} parent=5 // pred_check_branch
        %313 = sbr.rel (%p310) target = $region12
      $region11: #{tpu_custom_call.1} parent=5 // pred_region
        %s314 = ssub.s32 %s29, 1
        // Predicated region
        $region13: #{tpu_custom_call.1} parent=11 // pred_check
          %p315 = pneg %p158
        $region14: #{tpu_custom_call.1} parent=11 // pred_check_branch
          %317 = sbr.rel (%p315) target = $region16
        $region15: #{tpu_custom_call.1} parent=11 // pred_region
          %s319 = ssub.s32 256, 256
          %320 = vsyncadd [#allocation9], %s319
          %s321 = smul.addr %s41, 64
          %s322 = scalar_lea.hbm %s3, %s321
          %s323 = sshll.u32 [#allocation8], 4
          %s324 = int_to_ptr.vmem [resolvable:$true] %s323
          %329 = dma.hbm_to_vmem [thread:$0]  %s322, 256, %s324, [#allocation9], 64, 64, 4
        $region16: #{tpu_custom_call.1} parent=11 // pred_fallthru
          _
        // Predicated region
        $region17: #{tpu_custom_call.1} parent=11 // pred_check
          %p330 = pneg %p184
        $region18: #{tpu_custom_call.1} parent=11 // pred_check_branch
          %332 = sbr.rel (%p330) target = $region20
        $region19: #{tpu_custom_call.1} parent=11 // pred_region
          %s334 = ssub.s32 256, 256
          %335 = vsyncadd [#allocation9], %s334
          %s336 = smul.addr %s41, 64
          %s337 = scalar_lea.hbm %s4, %s336
          %s338 = sshll.u32 [#allocation10], 4
          %s339 = int_to_ptr.vmem [resolvable:$true] %s338
          %344 = dma.hbm_to_vmem [thread:$0]  %s337, 256, %s339, [#allocation9], 64, 64, 4
        $region20: #{tpu_custom_call.1} parent=11 // pred_fallthru
          _
        // Predicated region
        $region21: #{tpu_custom_call.1} parent=11 // pred_check
          %p345 = pneg %p210
        $region22: #{tpu_custom_call.1} parent=11 // pred_check_branch
          %347 = sbr.rel (%p345) target = $region24
        $region23: #{tpu_custom_call.1} parent=11 // pred_region
          %s349 = ssub.s32 256, 256
          %350 = vsyncadd [#allocation12], %s349
          %s351 = smul.addr %s41, 64
          %s352 = scalar_lea.hbm %s5, %s351
          %s353 = sshll.u32 [#allocation11], 4
          %s354 = int_to_ptr.vmem [resolvable:$true] %s353
          %359 = dma.hbm_to_vmem [thread:$0]  %s352, 256, %s354, [#allocation12], 64, 64, 4
        $region24: #{tpu_custom_call.1} parent=11 // pred_fallthru
          _
      $region12: #{tpu_custom_call.1} parent=5 // pred_fallthru
        _
      %p360 = scmp.lt.s32.totalorder %s29, 2
      // Predicated region
      $region25: #{tpu_custom_call.1} parent=5 // pred_check
        %p361 = pneg %p360
      $region26: #{tpu_custom_call.1} parent=5 // pred_check_branch
        %363 = sbr.rel (%p361) target = $region28
      $region27: #{tpu_custom_call.1} parent=5 // pred_region
        // Predicated region
        $region29: #{tpu_custom_call.1} parent=27 // pred_check
          %p364 = pneg %p70
        $region30: #{tpu_custom_call.1} parent=27 // pred_check_branch
          %366 = sbr.rel (%p364) target = $region32
        $region31: #{tpu_custom_call.1} parent=27 // pred_region
          %s367 = sand.u32 %s60, 1
          %s368 = scalar_lea.sflag [#allocation3], %s367
          %s369 = sand.u32 %s60, 1
          %s370 = smul.addr %s369, 4
          %s371 = scalar_lea.vmem [#allocation2], %s370
          %s373 = ssub.s32 64, 64
          %374 = vsyncadd %s368, %s373
          %s375 = sadd.s32 %s37, %s36
          %s376 = smul.addr %s375, 64
          %s377 = scalar_lea.hbm %s0, %s376
          %s379 = sshll.u32 %s371, 4
          %s380 = int_to_ptr.vmem [resolvable:$true] %s379
          %382 = dma.hbm_to_vmem [thread:$0]  %s377, 64, %s380, %s368
        $region32: #{tpu_custom_call.1} parent=27 // pred_fallthru
          _
        // Predicated region
        $region33: #{tpu_custom_call.1} parent=27 // pred_check
          %p383 = pneg %p98
        $region34: #{tpu_custom_call.1} parent=27 // pred_check_branch
          %385 = sbr.rel (%p383) target = $region36
        $region35: #{tpu_custom_call.1} parent=27 // pred_region
          %s386 = sand.u32 %s29, 1
          %s387 = scalar_lea.sflag [#allocation6], %s386
          %s388 = sand.u32 %s88, 1
          %s389 = smul.addr %s388, 4
          %s390 = scalar_lea.vmem [#allocation5], %s389
          %s392 = ssub.s32 64, 64
          %393 = vsyncadd %s387, %s392
          %s394 = sadd.s32 %s37, %s36
          %s395 = smul.addr %s394, 64
          %s396 = scalar_lea.hbm %s1, %s395
          %s398 = sshll.u32 %s390, 4
          %s399 = int_to_ptr.vmem [resolvable:$true] %s398
          %401 = dma.hbm_to_vmem [thread:$0]  %s396, 64, %s399, %s387
        $region36: #{tpu_custom_call.1} parent=27 // pred_fallthru
          _
        // Predicated region
        $region37: #{tpu_custom_call.1} parent=27 // pred_check
          %p402 = pneg %p126
        $region38: #{tpu_custom_call.1} parent=27 // pred_check_branch
          %404 = sbr.rel (%p402) target = $region40
        $region39: #{tpu_custom_call.1} parent=27 // pred_region
          %s405 = sand.u32 %s29, 1
          %s406 = scalar_lea.sflag [#allocation6], %s405
          %s407 = sand.u32 %s116, 1
          %s408 = smul.addr %s407, 4
          %s409 = scalar_lea.vmem [#allocation7], %s408
          %s411 = ssub.s32 64, 64
          %412 = vsyncadd %s406, %s411
          %s413 = sadd.s32 %s37, %s36
          %s414 = smul.addr %s413, 64
          %s415 = scalar_lea.hbm %s2, %s414
          %s417 = sshll.u32 %s409, 4
          %s418 = int_to_ptr.vmem [resolvable:$true] %s417
          %420 = dma.hbm_to_vmem [thread:$0]  %s415, 64, %s418, %s406
        $region40: #{tpu_custom_call.1} parent=27 // pred_fallthru
          _
      $region28: #{tpu_custom_call.1} parent=5 // pred_fallthru
        _
      %p421 = scmp.le.s32.totalorder 1, %s29
      %p422 = scmp.lt.s32.totalorder %s29, 3
      %p423 = pnand %p421, %p422
      %p424 = pneg %p423
      // Predicated region
      $region41: #{tpu_custom_call.1} parent=5 // pred_check
        _
      $region42: #{tpu_custom_call.1} parent=5 // pred_check_branch
        %426 = sbr.rel (%p423) target = $region44
      $region43: #{tpu_custom_call.1} parent=5 // pred_region
        %s427 = ssub.s32 %s29, 1
        %s428 = sand.u32 %s63, 1
        %s429 = scalar_lea.sflag [#allocation3], %s428
        %s430 = sand.u32 %s63, 1
        %s431 = smul.addr %s430, 4
        %s432 = scalar_lea.vmem [#allocation2], %s431
        // Predicated region
        $region45: #{tpu_custom_call.1} parent=43 // pred_check
          %p433 = pneg %p76
        $region46: #{tpu_custom_call.1} parent=43 // pred_check_branch
          %435 = sbr.rel (%p433) target = $region48
        $region47: #{tpu_custom_call.1} parent=43 // pred_region
          %436 = dma.done %s429, 64
        $region48: #{tpu_custom_call.1} parent=43 // pred_fallthru
          _
        %s437 = sand.u32 %s34, 1
        %s438 = scalar_lea.sflag [#allocation6], %s437
        %s439 = sand.u32 %s91, 1
        %s440 = smul.addr %s439, 4
        %s441 = scalar_lea.vmem [#allocation5], %s440
        // Predicated region
        $region49: #{tpu_custom_call.1} parent=43 // pred_check
          %p442 = pneg %p104
        $region50: #{tpu_custom_call.1} parent=43 // pred_check_branch
          %444 = sbr.rel (%p442) target = $region52
        $region51: #{tpu_custom_call.1} parent=43 // pred_region
          %445 = dma.done %s438, 64
        $region52: #{tpu_custom_call.1} parent=43 // pred_fallthru
          _
        %s446 = sand.u32 %s34, 1
        %s447 = scalar_lea.sflag [#allocation6], %s446
        %s448 = sand.u32 %s119, 1
        %s449 = smul.addr %s448, 4
        %s450 = scalar_lea.vmem [#allocation7], %s449
        // Predicated region
        $region53: #{tpu_custom_call.1} parent=43 // pred_check
          %p451 = pneg %p132
        $region54: #{tpu_custom_call.1} parent=43 // pred_check_branch
          %453 = sbr.rel (%p451) target = $region56
        $region55: #{tpu_custom_call.1} parent=43 // pred_region
          %454 = dma.done %s447, 64
        $region56: #{tpu_custom_call.1} parent=43 // pred_fallthru
          _
        // Predicated region
        $region57: #{tpu_custom_call.1} parent=43 // pred_check
          %p455 = pneg %p158
        $region58: #{tpu_custom_call.1} parent=43 // pred_check_branch
          %457 = sbr.rel (%p455) target = $region60
        $region59: #{tpu_custom_call.1} parent=43 // pred_region
          %458 = dma.done [#allocation9], 256
        $region60: #{tpu_custom_call.1} parent=43 // pred_fallthru
          _
        // Predicated region
        $region61: #{tpu_custom_call.1} parent=43 // pred_check
          %p459 = pneg %p184
        $region62: #{tpu_custom_call.1} parent=43 // pred_check_branch
          %461 = sbr.rel (%p459) target = $region64
        $region63: #{tpu_custom_call.1} parent=43 // pred_region
          %462 = dma.done [#allocation9], 256
        $region64: #{tpu_custom_call.1} parent=43 // pred_fallthru
          _
        // Predicated region
        $region65: #{tpu_custom_call.1} parent=43 // pred_check
          %p463 = pneg %p210
        $region66: #{tpu_custom_call.1} parent=43 // pred_check_branch
          %465 = sbr.rel (%p463) target = $region68
        $region67: #{tpu_custom_call.1} parent=43 // pred_region
          %466 = dma.done [#allocation12], 256
        $region68: #{tpu_custom_call.1} parent=43 // pred_fallthru
          _
        %s467 = sand.u32 %s63, 1
        %s468 = scalar_lea.sflag [#allocation3], %s467
        %s469 = sand.u32 %s63, 1
        %s470 = smul.addr %s469, 4
        %s471 = scalar_lea.vmem [#allocation2], %s470
        %p472 = pneg %p76
        %p473 = pneg %p73
        %s474 = sand.u32 %s34, 1
        %s475 = scalar_lea.sflag [#allocation6], %s474
        %s476 = sand.u32 %s91, 1
        %s477 = smul.addr %s476, 4
        %s478 = scalar_lea.vmem [#allocation5], %s477
        %p479 = pneg %p104
        %p480 = pneg %p101
        %s481 = sand.u32 %s34, 1
        %s482 = scalar_lea.sflag [#allocation6], %s481
        %s483 = sand.u32 %s119, 1
        %s484 = smul.addr %s483, 4
        %s485 = scalar_lea.vmem [#allocation7], %s484
        %p486 = pneg %p132
        %p487 = pneg %p129
        %p488 = pneg %p158
        %p489 = pneg %p155
        %p490 = pneg %p184
        %p491 = pneg %p181
        %p492 = pneg %p210
        %p493 = pneg %p207
        %p494 = pneg %p240
        %p495 = pneg %p237
        %s496 = sand.u32 %s227, 1
        %s497 = scalar_lea.sflag [#allocation4], %s496
        %s498 = sand.u32 %s227, 1
        %s499 = smul.addr %s498, 16
        %s500 = scalar_lea.vmem [#allocation13], %s499
        %p501 = pneg %p270
        %p502 = pneg %p267
        %s503 = sand.u32 %s34, 1
        %s504 = scalar_lea.sflag [#allocation15], %s503
        %s505 = sand.u32 %s257, 1
        %s506 = smul.addr %s505, 16
        %s507 = scalar_lea.vmem [#allocation14], %s506
        %p508 = pneg %p300
        %p509 = pneg %p297
        %s510 = sand.u32 %s34, 1
        %s511 = scalar_lea.sflag [#allocation15], %s510
        %s512 = sand.u32 %s287, 1
        %s513 = smul.addr %s512, 16
        %s514 = scalar_lea.vmem [#allocation16], %s513
        %s515 = smul.u32 4, %s41
        %s516 = smul.u32 4, %s41
        %s517 = smul.u32 4, %s41
        %v519 = vld [vmem:[%s432] sm:$0xf]
        %v520 = vld [vmem:[%s441] sm:$0xf]
        %v521 = vld [vmem:[%s450] sm:$0xf]
        %v522 = vld [vmem:[#allocation8] sm:$0xf]
        %v523 = vld [vmem:[#allocation8 + $0x4] sm:$0xf]
        %v524 = vld [vmem:[#allocation8 + $0x8] sm:$0xf]
        %v525 = vld [vmem:[#allocation8 + $0xc] sm:$0xf]
        %v530 = vunpack.c.l.b16 %v522
        %v531 = vunpack.c.l.b16 %v523
        %v532 = vunpack.c.l.b16 %v524
        %v533 = vunpack.c.l.b16 %v525
        %v534 = vpack.c.b16 %v531, %v530
        %v535 = vpack.c.b16 %v533, %v532
        %vm538 = vcmask 261120
        %v540 = vsel %vm538, %v519, 0
        %542 = vmatprep.subr.bf16.mxu0 0
        %543 = vmatpush1.bf16.msra.mxu0 0
        %544 = vmatprep.subr.bf16.mxu0 0
        %545 = vmatpush1.bf16.msra.mxu0 0
        %546 = vmatprep.subr.bf16.mxu0 0
        %547 = vmatpush1.bf16.msra.mxu0 0
        %548 = vmatprep.subr.bf16.mxu0 0
        %549 = vmatpush1.bf16.msra.mxu0 0
        %550 = vmatprep.subr.bf16.mxu0 0
        %551 = vmatpush1.bf16.msra.mxu0 0
        %552 = vmatprep.subr.bf16.mxu0 0
        %553 = vmatpush1.bf16.msra.mxu0 0
        %554 = vmatprep.subr.bf16.mxu0 0
        %555 = vmatpush1.bf16.msra.mxu0 %v535
        %556 = vmatprep.subr.bf16.mxu0 0
        %557 = vmatpush1.bf16.msra.mxu0 %v534
        %558 = vmatprep.subr.bf16.mxu0 0
        %559 = vmatpush2.bf16.msra.mxu0 0
        %560 = vmatprep.subr.bf16.mxu0 0
        %561 = vmatpush2.bf16.msra.mxu0 0
        %562 = vmatprep.subr.bf16.mxu0 0
        %563 = vmatpush2.bf16.msra.mxu0 0
        %564 = vmatprep.subr.bf16.mxu0 0
        %565 = vmatpush2.bf16.msra.mxu0 0
        %566 = vmatprep.subr.bf16.mxu0 0
        %567 = vmatpush2.bf16.msra.mxu0 0
        %568 = vmatprep.subr.bf16.mxu0 0
        %569 = vmatpush2.bf16.msra.mxu0 0
        %570 = vmatprep.subr.bf16.mxu0 0
        %571 = vmatpush2.bf16.msra.mxu0 0
        %572 = vmatprep.subr.bf16.mxu0 0
        %573 = vmatpush2.bf16.msra.mxu0 0
        %574 = vmatprep.mubr.bf16.mxu0 0
        %575 = vmatmul.mubr.bf16.gmra.mxu0 %v540
        %v576 = vpop.f32.mrf.mxu0
        %v577 = vadd.f32 0.0, %v576
        %v578 = vpop.f32.mrf.mxu0
        %v579 = vpop.f32.mrf.mxu0
        %v580 = vpop.f32.mrf.mxu0
        %581 = vdwg.mxu0
        %v582 = vld [vmem:[#allocation10] sm:$0xf]
        %v583 = vld [vmem:[#allocation10 + $0x4] sm:$0xf]
        %v584 = vld [vmem:[#allocation10 + $0x8] sm:$0xf]
        %v585 = vld [vmem:[#allocation10 + $0xc] sm:$0xf]
        %v590 = vunpack.c.l.b16 %v582
        %v591 = vunpack.c.l.b16 %v583
        %v592 = vunpack.c.l.b16 %v584
        %v593 = vunpack.c.l.b16 %v585
        %v594 = vpack.c.b16 %v591, %v590
        %v595 = vpack.c.b16 %v593, %v592
        %v599 = vsel %vm538, %v520, 0
        %601 = vmatprep.subr.bf16.mxu0 0
        %602 = vmatpush1.bf16.msra.mxu0 0
        %603 = vmatprep.subr.bf16.mxu0 0
        %604 = vmatpush1.bf16.msra.mxu0 0
        %605 = vmatprep.subr.bf16.mxu0 0
        %606 = vmatpush1.bf16.msra.mxu0 0
        %607 = vmatprep.subr.bf16.mxu0 0
        %608 = vmatpush1.bf16.msra.mxu0 0
        %609 = vmatprep.subr.bf16.mxu0 0
        %610 = vmatpush1.bf16.msra.mxu0 0
        %611 = vmatprep.subr.bf16.mxu0 0
        %612 = vmatpush1.bf16.msra.mxu0 0
        %613 = vmatprep.subr.bf16.mxu0 0
        %614 = vmatpush1.bf16.msra.mxu0 %v595
        %615 = vmatprep.subr.bf16.mxu0 0
        %616 = vmatpush1.bf16.msra.mxu0 %v594
        %617 = vmatprep.subr.bf16.mxu0 0
        %618 = vmatpush2.bf16.msra.mxu0 0
        %619 = vmatprep.subr.bf16.mxu0 0
        %620 = vmatpush2.bf16.msra.mxu0 0
        %621 = vmatprep.subr.bf16.mxu0 0
        %622 = vmatpush2.bf16.msra.mxu0 0
        %623 = vmatprep.subr.bf16.mxu0 0
        %624 = vmatpush2.bf16.msra.mxu0 0
        %625 = vmatprep.subr.bf16.mxu0 0
        %626 = vmatpush2.bf16.msra.mxu0 0
        %627 = vmatprep.subr.bf16.mxu0 0
        %628 = vmatpush2.bf16.msra.mxu0 0
        %629 = vmatprep.subr.bf16.mxu0 0
        %630 = vmatpush2.bf16.msra.mxu0 0
        %631 = vmatprep.subr.bf16.mxu0 0
        %632 = vmatpush2.bf16.msra.mxu0 0
        %633 = vmatprep.mubr.bf16.mxu0 0
        %634 = vmatmul.mubr.bf16.gmra.mxu0 %v599
        %v635 = vpop.f32.mrf.mxu0
        %v636 = vadd.f32 0.0, %v635
        %v637 = vpop.f32.mrf.mxu0
        %v638 = vpop.f32.mrf.mxu0
        %v639 = vpop.f32.mrf.mxu0
        %640 = vdwg.mxu0
        %v641 = vld [vmem:[#allocation11] sm:$0xf]
        %v642 = vld [vmem:[#allocation11 + $0x4] sm:$0xf]
        %v643 = vld [vmem:[#allocation11 + $0x8] sm:$0xf]
        %v644 = vld [vmem:[#allocation11 + $0xc] sm:$0xf]
        %v649 = vunpack.c.l.b16 %v641
        %v650 = vunpack.c.l.b16 %v642
        %v651 = vunpack.c.l.b16 %v643
        %v652 = vunpack.c.l.b16 %v644
        %v653 = vpack.c.b16 %v650, %v649
        %v654 = vpack.c.b16 %v652, %v651
        %v658 = vsel %vm538, %v521, 0
        %660 = vmatprep.subr.bf16.mxu0 0
        %661 = vmatpush1.bf16.msra.mxu0 0
        %662 = vmatprep.subr.bf16.mxu0 0
        %663 = vmatpush1.bf16.msra.mxu0 0
        %664 = vmatprep.subr.bf16.mxu0 0
        %665 = vmatpush1.bf16.msra.mxu0 0
        %666 = vmatprep.subr.bf16.mxu0 0
        %667 = vmatpush1.bf16.msra.mxu0 0
        %668 = vmatprep.subr.bf16.mxu0 0
        %669 = vmatpush1.bf16.msra.mxu0 0
        %670 = vmatprep.subr.bf16.mxu0 0
        %671 = vmatpush1.bf16.msra.mxu0 0
        %672 = vmatprep.subr.bf16.mxu0 0
        %673 = vmatpush1.bf16.msra.mxu0 %v654
        %674 = vmatprep.subr.bf16.mxu0 0
        %675 = vmatpush1.bf16.msra.mxu0 %v653
        %676 = vmatprep.subr.bf16.mxu0 0
        %677 = vmatpush2.bf16.msra.mxu0 0
        %678 = vmatprep.subr.bf16.mxu0 0
        %679 = vmatpush2.bf16.msra.mxu0 0
        %680 = vmatprep.subr.bf16.mxu0 0
        %681 = vmatpush2.bf16.msra.mxu0 0
        %682 = vmatprep.subr.bf16.mxu0 0
        %683 = vmatpush2.bf16.msra.mxu0 0
        %684 = vmatprep.subr.bf16.mxu0 0
        %685 = vmatpush2.bf16.msra.mxu0 0
        %686 = vmatprep.subr.bf16.mxu0 0
        %687 = vmatpush2.bf16.msra.mxu0 0
        %688 = vmatprep.subr.bf16.mxu0 0
        %689 = vmatpush2.bf16.msra.mxu0 0
        %690 = vmatprep.subr.bf16.mxu0 0
        %691 = vmatpush2.bf16.msra.mxu0 0
        %692 = vmatprep.mubr.bf16.mxu0 0
        %693 = vmatmul.mubr.bf16.gmra.mxu0 %v658
        %v694 = vpop.f32.mrf.mxu0
        %v695 = vadd.f32 0.0, %v694
        %v696 = vpop.f32.mrf.mxu0
        %v697 = vpop.f32.mrf.mxu0
        %v698 = vpop.f32.mrf.mxu0
        %699 = vdwg.mxu0
        %v700 = vpack.c.bf16 %v577, %v577
        %vm701 = vcmask 60416
        %702 = vst.msk [vmem:[%s500] sm:$0xf] %vm701, %v700
        %v703 = vpack.c.bf16 %v695, %v695
        %704 = vst.msk [vmem:[%s514] sm:$0xf] %vm701, %v703
        %705 = vxpose.xlu0.b32.start [1/16] %v636, 128
        %706 = vxpose.xlu0.b32.cont [2/16] 0.0, 128
        %707 = vxpose.xlu0.b32.cont [3/16] 0.0, 128
        %708 = vxpose.xlu0.b32.cont [4/16] 0.0, 128
        %709 = vxpose.xlu0.b32.cont [5/16] 0.0, 128
        %710 = vxpose.xlu0.b32.cont [6/16] 0.0, 128
        %711 = vxpose.xlu0.b32.cont [7/16] 0.0, 128
        %712 = vxpose.xlu0.b32.cont [8/16] 0.0, 128
        %713 = vxpose.xlu0.b32.cont [9/16] 0.0, 128
        %714 = vxpose.xlu0.b32.cont [10/16] 0.0, 128
        %715 = vxpose.xlu0.b32.cont [11/16] 0.0, 128
        %716 = vxpose.xlu0.b32.cont [12/16] 0.0, 128
        %717 = vxpose.xlu0.b32.cont [13/16] 0.0, 128
        %718 = vxpose.xlu0.b32.cont [14/16] 0.0, 128
        %719 = vxpose.xlu0.b32.cont [15/16] 0.0, 128
        %720 = vxpose.xlu0.b32.end [16/16] 0.0, 128
        %v721 = vpop.trf.xlu0
        %v722 = vpop.trf.xlu0
        %v723 = vpop.trf.xlu0
        %v724 = vpop.trf.xlu0
        %v725 = vpop.trf.xlu0
        %v726 = vpop.trf.xlu0
        %v727 = vpop.trf.xlu0
        %v728 = vpop.trf.xlu0
        %v729 = vpop.trf.xlu0
        %v730 = vpop.trf.xlu0
        %v731 = vpop.trf.xlu0
        %v732 = vpop.trf.xlu0
        %v733 = vpop.trf.xlu0
        %v734 = vpop.trf.xlu0
        %v735 = vpop.trf.xlu0
        %v736 = vpop.trf.xlu0
        %v737 = vpack.c.bf16 %v721, %v721
        %738 = vst.msk [vmem:[%s507] sm:$0xf] %vm701, %v737
        %v740 = vunpack.c.l.b16 %v700
        %v741 = vpack.c.b16 %v740, %v740
        %742 = vrot.lane.b32.xlu0 %v741, 120
        %v743 = vpop.permute.xlu0 %742
        %s745 = scalar_lea.vmem %s500, 4 [#allocation13]
        %746 = vst.msk [vmem:[%s745] sm:$0xf] %vm701, %v743
        %v748 = vunpack.c.l.b16 %v703
        %v749 = vpack.c.b16 %v748, %v748
        %750 = vrot.lane.b32.xlu0 %v749, 120
        %v751 = vpop.permute.xlu0 %750
        %s753 = scalar_lea.vmem %s514, 4 [#allocation16]
        %754 = vst.msk [vmem:[%s753] sm:$0xf] %vm701, %v751
        %756 = vrot.lane.b32.xlu0 %v636, 120
        %v757 = vpop.permute.xlu0 %756
        %759 = vxpose.xlu0.b32.start [1/16] %v757, 128
        %760 = vxpose.xlu0.b32.cont [2/16] 0.0, 128
        %761 = vxpose.xlu0.b32.cont [3/16] 0.0, 128
        %762 = vxpose.xlu0.b32.cont [4/16] 0.0, 128
        %763 = vxpose.xlu0.b32.cont [5/16] 0.0, 128
        %764 = vxpose.xlu0.b32.cont [6/16] 0.0, 128
        %765 = vxpose.xlu0.b32.cont [7/16] 0.0, 128
        %766 = vxpose.xlu0.b32.cont [8/16] 0.0, 128
        %767 = vxpose.xlu0.b32.cont [9/16] 0.0, 128
        %768 = vxpose.xlu0.b32.cont [10/16] 0.0, 128
        %769 = vxpose.xlu0.b32.cont [11/16] 0.0, 128
        %770 = vxpose.xlu0.b32.cont [12/16] 0.0, 128
        %771 = vxpose.xlu0.b32.cont [13/16] 0.0, 128
        %772 = vxpose.xlu0.b32.cont [14/16] 0.0, 128
        %773 = vxpose.xlu0.b32.cont [15/16] 0.0, 128
        %774 = vxpose.xlu0.b32.end [16/16] 0.0, 128
        %v775 = vpop.trf.xlu0
        %v776 = vpop.trf.xlu0
        %v777 = vpop.trf.xlu0
        %v778 = vpop.trf.xlu0
        %v779 = vpop.trf.xlu0
        %v780 = vpop.trf.xlu0
        %v781 = vpop.trf.xlu0
        %v782 = vpop.trf.xlu0
        %v783 = vpop.trf.xlu0
        %v784 = vpop.trf.xlu0
        %v785 = vpop.trf.xlu0
        %v786 = vpop.trf.xlu0
        %v787 = vpop.trf.xlu0
        %v788 = vpop.trf.xlu0
        %v789 = vpop.trf.xlu0
        %v790 = vpop.trf.xlu0
        %v791 = vpack.c.bf16 %v775, %v775
        %s792 = scalar_lea.vmem %s507, 4 [#allocation14]
        %793 = vst.msk [vmem:[%s792] sm:$0xf] %vm701, %v791
        %794 = vrot.lane.b32.xlu0 %v741, 112
        %v795 = vpop.permute.xlu0 %794
        %s797 = scalar_lea.vmem %s500, 8 [#allocation13]
        %798 = vst.msk [vmem:[%s797] sm:$0xf] %vm701, %v795
        %799 = vrot.lane.b32.xlu0 %v749, 112
        %v800 = vpop.permute.xlu0 %799
        %s802 = scalar_lea.vmem %s514, 8 [#allocation16]
        %803 = vst.msk [vmem:[%s802] sm:$0xf] %vm701, %v800
        %804 = vrot.lane.b32.xlu0 %v636, 112
        %v805 = vpop.permute.xlu0 %804
        %807 = vxpose.xlu0.b32.start [1/16] %v805, 128
        %808 = vxpose.xlu0.b32.cont [2/16] 0.0, 128
        %809 = vxpose.xlu0.b32.cont [3/16] 0.0, 128
        %810 = vxpose.xlu0.b32.cont [4/16] 0.0, 128
        %811 = vxpose.xlu0.b32.cont [5/16] 0.0, 128
        %812 = vxpose.xlu0.b32.cont [6/16] 0.0, 128
        %813 = vxpose.xlu0.b32.cont [7/16] 0.0, 128
        %814 = vxpose.xlu0.b32.cont [8/16] 0.0, 128
        %815 = vxpose.xlu0.b32.cont [9/16] 0.0, 128
        %816 = vxpose.xlu0.b32.cont [10/16] 0.0, 128
        %817 = vxpose.xlu0.b32.cont [11/16] 0.0, 128
        %818 = vxpose.xlu0.b32.cont [12/16] 0.0, 128
        %819 = vxpose.xlu0.b32.cont [13/16] 0.0, 128
        %820 = vxpose.xlu0.b32.cont [14/16] 0.0, 128
        %821 = vxpose.xlu0.b32.cont [15/16] 0.0, 128
        %822 = vxpose.xlu0.b32.end [16/16] 0.0, 128
        %v823 = vpop.trf.xlu0
        %v824 = vpop.trf.xlu0
        %v825 = vpop.trf.xlu0
        %v826 = vpop.trf.xlu0
        %v827 = vpop.trf.xlu0
        %v828 = vpop.trf.xlu0
        %v829 = vpop.trf.xlu0
        %v830 = vpop.trf.xlu0
        %v831 = vpop.trf.xlu0
        %v832 = vpop.trf.xlu0
        %v833 = vpop.trf.xlu0
        %v834 = vpop.trf.xlu0
        %v835 = vpop.trf.xlu0
        %v836 = vpop.trf.xlu0
        %v837 = vpop.trf.xlu0
        %v838 = vpop.trf.xlu0
        %v839 = vpack.c.bf16 %v823, %v823
        %s840 = scalar_lea.vmem %s507, 8 [#allocation14]
        %841 = vst.msk [vmem:[%s840] sm:$0xf] %vm701, %v839
        %842 = vrot.lane.b32.xlu0 %v741, 104
        %v843 = vpop.permute.xlu0 %842
        %s845 = scalar_lea.vmem %s500, 12 [#allocation13]
        %846 = vst.msk [vmem:[%s845] sm:$0xf] %vm701, %v843
        %847 = vrot.lane.b32.xlu0 %v749, 104
        %v848 = vpop.permute.xlu0 %847
        %s850 = scalar_lea.vmem %s514, 12 [#allocation16]
        %851 = vst.msk [vmem:[%s850] sm:$0xf] %vm701, %v848
        %852 = vrot.lane.b32.xlu0 %v636, 104
        %v853 = vpop.permute.xlu0 %852
        %855 = vxpose.xlu0.b32.start [1/16] %v853, 128
        %856 = vxpose.xlu0.b32.cont [2/16] 0.0, 128
        %857 = vxpose.xlu0.b32.cont [3/16] 0.0, 128
        %858 = vxpose.xlu0.b32.cont [4/16] 0.0, 128
        %859 = vxpose.xlu0.b32.cont [5/16] 0.0, 128
        %860 = vxpose.xlu0.b32.cont [6/16] 0.0, 128
        %861 = vxpose.xlu0.b32.cont [7/16] 0.0, 128
        %862 = vxpose.xlu0.b32.cont [8/16] 0.0, 128
        %863 = vxpose.xlu0.b32.cont [9/16] 0.0, 128
        %864 = vxpose.xlu0.b32.cont [10/16] 0.0, 128
        %865 = vxpose.xlu0.b32.cont [11/16] 0.0, 128
        %866 = vxpose.xlu0.b32.cont [12/16] 0.0, 128
        %867 = vxpose.xlu0.b32.cont [13/16] 0.0, 128
        %868 = vxpose.xlu0.b32.cont [14/16] 0.0, 128
        %869 = vxpose.xlu0.b32.cont [15/16] 0.0, 128
        %870 = vxpose.xlu0.b32.end [16/16] 0.0, 128
        %v871 = vpop.trf.xlu0
        %v872 = vpop.trf.xlu0
        %v873 = vpop.trf.xlu0
        %v874 = vpop.trf.xlu0
        %v875 = vpop.trf.xlu0
        %v876 = vpop.trf.xlu0
        %v877 = vpop.trf.xlu0
        %v878 = vpop.trf.xlu0
        %v879 = vpop.trf.xlu0
        %v880 = vpop.trf.xlu0
        %v881 = vpop.trf.xlu0
        %v882 = vpop.trf.xlu0
        %v883 = vpop.trf.xlu0
        %v884 = vpop.trf.xlu0
        %v885 = vpop.trf.xlu0
        %v886 = vpop.trf.xlu0
        %v887 = vpack.c.bf16 %v871, %v871
        %s888 = scalar_lea.vmem %s507, 12 [#allocation14]
        %889 = vst.msk [vmem:[%s888] sm:$0xf] %vm701, %v887
        %s890 = sand.u32 %s227, 1
        %s891 = scalar_lea.sflag [#allocation4], %s890
        %s892 = sand.u32 %s227, 1
        %s893 = smul.addr %s892, 16
        %s894 = scalar_lea.vmem [#allocation13], %s893
        %s895 = sand.u32 %s34, 1
        %s896 = scalar_lea.sflag [#allocation15], %s895
        %s897 = sand.u32 %s257, 1
        %s898 = smul.addr %s897, 16
        %s899 = scalar_lea.vmem [#allocation14], %s898
        %s900 = sand.u32 %s34, 1
        %s901 = scalar_lea.sflag [#allocation15], %s900
        %s902 = sand.u32 %s287, 1
        %s903 = smul.addr %s902, 16
        %s904 = scalar_lea.vmem [#allocation16], %s903
        // Predicated region
        $region69: #{tpu_custom_call.1} parent=43 // pred_check
          %p905 = pneg %p237
        $region70: #{tpu_custom_call.1} parent=43 // pred_check_branch
          %907 = sbr.rel (%p905) target = $region72
        $region71: #{tpu_custom_call.1} parent=43 // pred_region
          %s908 = smul.u32 4, %s41
          %s910 = ssub.s32 256, 256
          %911 = vsyncadd %s891, %s910
          %s912 = sadd.s32 %s40, %s908
          %s913 = smul.addr %s39, 4
          %s914 = sadd.s32 %s912, %s913
          %s915 = smul.addr %s914, 64
          %s916 = scalar_lea.hbm %s6, %s915
          %s917 = sshll.u32 %s894, 4
          %s918 = int_to_ptr.vmem [resolvable:$true] %s917
          %923 = dma.vmem_to_hbm [thread:$0]  %s918, 256, %s916, %s891, 64, 64, 4
        $region72: #{tpu_custom_call.1} parent=43 // pred_fallthru
          _
        // Predicated region
        $region73: #{tpu_custom_call.1} parent=43 // pred_check
          %p924 = pneg %p267
        $region74: #{tpu_custom_call.1} parent=43 // pred_check_branch
          %926 = sbr.rel (%p924) target = $region76
        $region75: #{tpu_custom_call.1} parent=43 // pred_region
          %s927 = smul.u32 4, %s41
          %s929 = ssub.s32 256, 256
          %930 = vsyncadd %s896, %s929
          %s931 = sadd.s32 %s40, %s927
          %s932 = smul.addr %s39, 4
          %s933 = sadd.s32 %s931, %s932
          %s934 = smul.addr %s933, 64
          %s935 = scalar_lea.hbm %s7, %s934
          %s936 = sshll.u32 %s899, 4
          %s937 = int_to_ptr.vmem [resolvable:$true] %s936
          %942 = dma.vmem_to_hbm [thread:$0]  %s937, 256, %s935, %s896, 64, 64, 4
        $region76: #{tpu_custom_call.1} parent=43 // pred_fallthru
          _
        // Predicated region
        $region77: #{tpu_custom_call.1} parent=43 // pred_check
          %p943 = pneg %p297
        $region78: #{tpu_custom_call.1} parent=43 // pred_check_branch
          %945 = sbr.rel (%p943) target = $region80
        $region79: #{tpu_custom_call.1} parent=43 // pred_region
          %s946 = smul.u32 4, %s41
          %s948 = ssub.s32 256, 256
          %949 = vsyncadd %s901, %s948
          %s950 = sadd.s32 %s40, %s946
          %s951 = smul.addr %s39, 4
          %s952 = sadd.s32 %s950, %s951
          %s953 = smul.addr %s952, 64
          %s954 = scalar_lea.hbm %s8, %s953
          %s955 = sshll.u32 %s904, 4
          %s956 = int_to_ptr.vmem [resolvable:$true] %s955
          %961 = dma.vmem_to_hbm [thread:$0]  %s956, 256, %s954, %s901, 64, 64, 4
        $region80: #{tpu_custom_call.1} parent=43 // pred_fallthru
          _
      $region44: #{tpu_custom_call.1} parent=5 // pred_fallthru
        _
      %p962 = scmp.le.s32.totalorder 2, %s29
      // Predicated region
      $region81: #{tpu_custom_call.1} parent=5 // pred_check
        %p963 = pneg %p962
      $region82: #{tpu_custom_call.1} parent=5 // pred_check_branch
        %965 = sbr.rel (%p963) target = $region84
      $region83: #{tpu_custom_call.1} parent=5 // pred_region
        %s966 = ssub.s32 %s29, 2
        // Predicated region
        $region85: #{tpu_custom_call.1} parent=83 // pred_check
          %p967 = pneg %p243
        $region86: #{tpu_custom_call.1} parent=83 // pred_check_branch
          %969 = sbr.rel (%p967) target = $region88
        $region87: #{tpu_custom_call.1} parent=83 // pred_region
          %s970 = sand.u32 %s228, 1
          %s971 = scalar_lea.sflag [#allocation4], %s970
          %s972 = sand.u32 %s228, 1
          %s973 = smul.addr %s972, 16
          %s974 = scalar_lea.vmem [#allocation13], %s973
          %975 = dma.done %s971, 256
        $region88: #{tpu_custom_call.1} parent=83 // pred_fallthru
          _
        // Predicated region
        $region89: #{tpu_custom_call.1} parent=83 // pred_check
          %p976 = pneg %p273
        $region90: #{tpu_custom_call.1} parent=83 // pred_check_branch
          %978 = sbr.rel (%p976) target = $region92
        $region91: #{tpu_custom_call.1} parent=83 // pred_region
          %s979 = sand.u32 %s35, 1
          %s980 = scalar_lea.sflag [#allocation15], %s979
          %s981 = sand.u32 %s258, 1
          %s982 = smul.addr %s981, 16
          %s983 = scalar_lea.vmem [#allocation14], %s982
          %984 = dma.done %s980, 256
        $region92: #{tpu_custom_call.1} parent=83 // pred_fallthru
          _
        // Predicated region
        $region93: #{tpu_custom_call.1} parent=83 // pred_check
          %p985 = pneg %p303
        $region94: #{tpu_custom_call.1} parent=83 // pred_check_branch
          %987 = sbr.rel (%p985) target = $region96
        $region95: #{tpu_custom_call.1} parent=83 // pred_region
          %s988 = sand.u32 %s35, 1
          %s989 = scalar_lea.sflag [#allocation15], %s988
          %s990 = sand.u32 %s288, 1
          %s991 = smul.addr %s990, 16
          %s992 = scalar_lea.vmem [#allocation16], %s991
          %993 = dma.done %s989, 256
        $region96: #{tpu_custom_call.1} parent=83 // pred_fallthru
          _
      $region84: #{tpu_custom_call.1} parent=5 // pred_fallthru
        _
    $region6: #{tpu_custom_call.1} parent=1 // loop_footer
      %s33 = sadd.s32 1, %s29
    $region7: #{tpu_custom_call.1} parent=1 // loop_footer_branch
      %28 = sbr.rel target = $region3
    $region8: #{tpu_custom_call.1} parent=1 // loop_exit
      _
    %994 = vsyncpa [#allocation3], 1
    %s995 = scalar_lea.sflag [#allocation3], 1
    %996 = vsyncpa %s995, 1
    %997 = vsyncpa [#allocation6], 1
    %s998 = scalar_lea.sflag [#allocation6], 1
    %999 = vsyncpa %s998, 1
    %1000 = vsyncpa [#allocation9], 1
    %1001 = vsyncpa [#allocation12], 1
    %1002 = vsyncpa [#allocation4], 1
    %s1003 = scalar_lea.sflag [#allocation4], 1
    %1004 = vsyncpa %s1003, 1
    %1005 = vsyncpa [#allocation15], 1
    %s1006 = scalar_lea.sflag [#allocation15], 1
    %1007 = vsyncpa %s1006, 1

</llo_original>
